<compile_context>
chip_gen: v7x
topology: tpu7x:2x2x1
jax: 0.10.0
libtpu: 0.0.40
codegen_flags: <defaults>
</compile_context>

<pallas_src>
import jax
import jax.numpy as jnp
from jax import lax
from jax.experimental import pallas as pl
from jax.experimental.pallas import tpu as pltpu


# -----------------------------------------------------------------------------
# Pallas kernel: fused (embedding @ W_ih) gather + GRU time loop + final fc.
# -----------------------------------------------------------------------------
def char_gru_kernel(tok_ref,      # (T*Bp, 1)  int32 tokens, time-major, batch-padded
                    gtab_ref,     # (Vp, 3Hc)  bf16 fused table: emb @ W_ih^T, gate-packed
                    h0_ref,       # (Bp, Hc)   f32  initial hidden state
                    whh_ref,      # (Hc, 3Hc)  bf16 hidden->gates, gate g at cols [g*Hc:(g+1)*Hc]
                    bih_ref,      # (1, 3Hc)   f32  b_ih with r/z parts of b_hh folded in
                    bhn_ref,      # (1, Hc)    f32  b_hh for the n gate only
                    wfc_ref,      # (Hc, Op)   bf16 fc weight (transposed, lane-padded)
                    bfc_ref,      # (1, Op)    f32
                    logits_ref,   # (Bp, Op)   f32  out: fc(h_T)
                    hout_ref,     # (Bp, Hc)   f32  out: final hidden state
                    gi_scratch):  # VMEM (T*Bp, 3Hc) f32: precomputed input-path gates
    Bp, Hc = h0_ref.shape
    TBp = tok_ref.shape[0]
    T = TBp // Bp
    Vp = gtab_ref.shape[0]

    # ---- Prologue (no recurrent dependency): one MXU pass for all timesteps ----
    # gi[t*Bp+b] = emb[tok] @ W_ih^T  (+ folded biases), via one-hot @ fused table.
    tok = tok_ref[...]                                            # (T*Bp, 1) int32
    iota = lax.broadcasted_iota(jnp.int32, (TBp, Vp), 1)
    onehot = (tok == iota).astype(jnp.bfloat16)                   # (T*Bp, Vp)
    gi_scratch[...] = (
        jnp.dot(onehot, gtab_ref[...], preferred_element_type=jnp.float32)
        + bih_ref[...]                                            # bias kept in f32
    )

    # ---- Hoisted loop invariants ----
    whh = whh_ref[...]                                            # (Hc, 3Hc) bf16
    bhn = jnp.broadcast_to(bhn_ref[...], (Bp, Hc))                # broadcast once
    h0 = h0_ref[...]                                              # (Bp, Hc) f32

    # ---- Serial recurrence: h carried in vregs; only h@W_hh + gate math ----
    def step(t, h_prev):
        gh = jnp.dot(h_prev.astype(jnp.bfloat16), whh,
                     preferred_element_type=jnp.float32)          # (Bp, 3Hc)
        row0 = pl.multiple_of(t * Bp, 8)
        gi = gi_scratch[pl.ds(row0, Bp), :]                       # (Bp, 3Hc)

        r = jax.nn.sigmoid(gi[:, 0:Hc] + gh[:, 0:Hc])
        z = jax.nn.sigmoid(gi[:, Hc:2 * Hc] + gh[:, Hc:2 * Hc])
        n = jnp.tanh(gi[:, 2 * Hc:3 * Hc] + r * (gh[:, 2 * Hc:3 * Hc] + bhn))
        return (1.0 - z) * n + z * h_prev

    h_last = lax.fori_loop(0, T, step, h0, unroll=True)

    # ---- Finalize: last hidden state + fc (lane-dense logits store) ----
    hout_ref[...] = h_last
    logits_ref[...] = (
        jnp.dot(h_last.astype(jnp.bfloat16), wfc_ref[...],
                preferred_element_type=jnp.float32)
        + bfc_ref[...]
    )


# -----------------------------------------------------------------------------
# One-time weight packing (outside the per-call jit).
# -----------------------------------------------------------------------------
def _round_up(n, m):
    return ((n + m - 1) // m) * m


def _pack_params(params):
    emb = params["embedding"].astype(jnp.float32)   # (V, H)
    w_ih = params["w_ih"].astype(jnp.float32)       # (3H, H) torch layout [r|z|n]
    w_hh = params["w_hh"].astype(jnp.float32)       # (3H, H)
    b_ih = params["b_ih"].astype(jnp.float32)       # (3H,)
    b_hh = params["b_hh"].astype(jnp.float32)       # (3H,)
    w_fc = params["w_fc"].astype(jnp.float32)       # (O, H)
    b_fc = params["b_fc"].astype(jnp.float32)       # (O,)

    V, H = emb.shape
    O = w_fc.shape[0]

    # Per-gate column stride: compact (Hc = H) when all three gates fit into one
    # 128-lane vreg; otherwise one 128-aligned lane block per gate (H >= 128).
    Hc = H if 3 * H <= 128 else _round_up(H, 128)
    Op = _round_up(O, 128)     # lane-dense logits
    Vp = _round_up(V, 8)       # sublane-aligned fused table rows

    def pack_gate_cols(m):     # (R, 3H) -> (R, 3Hc), gate g at cols [g*Hc : g*Hc+H]
        return jnp.concatenate(
            [jnp.pad(m[:, g * H:(g + 1) * H], ((0, 0), (0, Hc - H)))
             for g in range(3)], axis=1)

    def pack_gate_matrix(w):   # (3H, H) torch -> (Hc, 3Hc)
        w_t = w.T              # (H, 3H)
        return jnp.concatenate(
            [jnp.pad(w_t[:, g * H:(g + 1) * H], ((0, Hc - H), (0, Hc - H)))
             for g in range(3)], axis=1)

    def pack_gate_bias(b):     # (3H,) -> (1, 3Hc)
        return jnp.concatenate(
            [jnp.pad(b[g * H:(g + 1) * H], (0, Hc - H)) for g in range(3)]
        ).reshape(1, 3 * Hc)

    # Fused embedding + input projection table: G[v] = emb[v] @ W_ih^T (gate-packed).
    gtab = pack_gate_cols(jnp.dot(emb, w_ih.T,
                                  precision=lax.Precision.HIGHEST))      # (V, 3Hc)
    gtab = jnp.pad(gtab, ((0, Vp - V), (0, 0)))                          # (Vp, 3Hc)

    # Fold the r/z parts of b_hh into b_ih (they only ever appear summed);
    # the n-gate part of b_hh must stay separate (multiplied by r).
    b_comb = jnp.concatenate([b_ih[:2 * H] + b_hh[:2 * H], b_ih[2 * H:]])

    packed = {
        "gtab": gtab.astype(jnp.bfloat16),                               # (Vp, 3Hc)
        "whh": pack_gate_matrix(w_hh).astype(jnp.bfloat16),              # (Hc, 3Hc)
        "bih": pack_gate_bias(b_comb),                                   # (1, 3Hc) f32
        "bhn": jnp.pad(b_hh[2 * H:3 * H], (0, Hc - H)).reshape(1, Hc),   # (1, Hc)  f32
        "wfc": jnp.pad(w_fc.T, ((0, Hc - H), (0, Op - O))).astype(jnp.bfloat16),  # (Hc, Op)
        "bfc": jnp.pad(b_fc, (0, Op - O)).reshape(1, Op),                # (1, Op)  f32
    }
    dims = dict(V=V, H=H, O=O, Hc=Hc, Op=Op, Vp=Vp)
    return packed, dims


def make_char_gru_forward(params):
    """Pack weights once; return a jitted forward(x_tokens, hidden) closure."""
    packed, d = _pack_params(params)
    H, O, Hc, Op = d["H"], d["O"], d["Hc"], d["Op"]

    @jax.jit
    def forward(x_tokens, hidden):
        # x_tokens: (B, T) int ; hidden: (1, B, H) ; returns (logits (B,O), hidden (1,B,H))
        B, T = x_tokens.shape
        Bp = _round_up(B, 8)   # sublane-align batch

        # Tokens: time-major, batch padded with token 0 (padded rows are sliced off).
        tok_tm = jnp.zeros((T, Bp), jnp.int32).at[:, :B].set(x_tokens.T.astype(jnp.int32))
        tok_col = tok_tm.reshape(T * Bp, 1)

        h0_p = jnp.zeros((Bp, Hc), jnp.float32).at[:B, :H].set(
            hidden[0].astype(jnp.float32))

        vmem = pl.BlockSpec(memory_space=pltpu.MemorySpace.VMEM)

        logits_p, hout_p = pl.pallas_call(
            char_gru_kernel,
            out_shape=(
                jax.ShapeDtypeStruct((Bp, Op), jnp.float32),
                jax.ShapeDtypeStruct((Bp, Hc), jnp.float32),
            ),
            in_specs=[vmem] * 8,
            out_specs=(vmem, vmem),
            scratch_shapes=[
                pltpu.VMEM((T * Bp, 3 * Hc), jnp.float32),   # gi for all steps
            ],
            compiler_params=pltpu.CompilerParams(vmem_limit_bytes=32 * 1024 * 1024),
        )(tok_col, packed["gtab"], h0_p, packed["whh"], packed["bih"],
          packed["bhn"], packed["wfc"], packed["bfc"])

        logits = logits_p[:B, :O]
        h_out = hout_p[:B, :H][None, :, :]    # (1, B, H), like nn.GRU
        return logits, h_out

    return forward


# -----------------------------------------------------------------------------
# Pure-JAX reference (mirrors PyTorch nn.GRU / nn.Linear semantics exactly).
# -----------------------------------------------------------------------------
def char_gru_reference(x_tokens, hidden, params):
    def mm(a, b):
        return jnp.dot(a, b, precision=lax.Precision.HIGHEST)

    emb = jnp.take(params["embedding"], x_tokens, axis=0)    # (B, T, H)
    H = params["embedding"].shape[1]
    w_ih, w_hh = params["w_ih"], params["w_hh"]
    b_ih, b_hh = params["b_ih"], params["b_hh"]
    h = hidden[0]
    T = x_tokens.shape[1]
    for t in range(T):
        x_t = emb[:, t, :]
        gi = mm(x_t, w_ih.T) + b_ih
        gh = mm(h, w_hh.T) + b_hh
        i_r, i_z, i_n = gi[:, :H], gi[:, H:2 * H], gi[:, 2 * H:]
        h_r, h_z, h_n = gh[:, :H], gh[:, H:2 * H], gh[:, 2 * H:]
        r = jax.nn.sigmoid(i_r + h_r)
        z = jax.nn.sigmoid(i_z + h_z)
        n = jnp.tanh(i_n + r * h_n)
        h = (1.0 - z) * n + z * h
    logits = mm(h, params["w_fc"].T) + params["b_fc"]
    return logits, h[None, :, :]


# -----------------------------------------------------------------------------
# Main: deterministic synthetic params + inputs at small shapes.
# -----------------------------------------------------------------------------
if __name__ == "__main__":
    # Small shapes consistent with the module:
    #   vocab (input_size == output_size) = 16, hidden = 32, batch = 2, seq = 8
    V, H, O = 16, 32, 16
    B, T = 2, 8

    key = jax.random.PRNGKey(0)
    keys = jax.random.split(key, 8)
    scale = 0.1
    params = {
        "embedding": scale * jax.random.normal(keys[0], (V, H), jnp.float32),
        "w_ih": scale * jax.random.normal(keys[1], (3 * H, H), jnp.float32),
        "w_hh": scale * jax.random.normal(keys[2], (3 * H, H), jnp.float32),
        "b_ih": scale * jax.random.normal(keys[3], (3 * H,), jnp.float32),
        "b_hh": scale * jax.random.normal(keys[4], (3 * H,), jnp.float32),
        "w_fc": scale * jax.random.normal(keys[5], (O, H), jnp.float32),
        "b_fc": scale * jax.random.normal(keys[6], (O,), jnp.float32),
    }

    x_tokens = jax.random.randint(keys[7], (B, T), 0, V, dtype=jnp.int32)
    hidden0 = jnp.zeros((1, B, H), jnp.float32)   # init_hidden

    forward = make_char_gru_forward(params)       # packs weights ONCE (bf16, fused)
    logits, h_out = forward(x_tokens, hidden0)
    jax.block_until_ready((logits, h_out))
    # Second call reuses the cached packed weights (no re-padding per call).
    logits, h_out = forward(x_tokens, hidden0)
    jax.block_until_ready((logits, h_out))

    ref_logits, ref_h = char_gru_reference(x_tokens, hidden0, params)
    assert logits.shape == (B, O) and h_out.shape == (1, B, H)
    # bf16 matmul weights -> relaxed tolerance (~1e-2), per perf review.
    assert jnp.allclose(logits, ref_logits, atol=2e-2, rtol=2e-2)
    assert jnp.allclose(h_out, ref_h, atol=2e-2, rtol=2e-2)

    print("KERNEL_OK")
</pallas_src>

<mosaic_0001>
module attributes {stable_mosaic.version = 11 : i64} {
  func.func @char_gru_kernel(%arg0: memref<64x1xi32, #tpu.memory_space<vmem>>, %arg1: memref<16x96xbf16, #tpu.memory_space<vmem>>, %arg2: memref<8x32xf32, #tpu.memory_space<vmem>>, %arg3: memref<32x96xbf16, #tpu.memory_space<vmem>>, %arg4: memref<1x96xf32, #tpu.memory_space<vmem>>, %arg5: memref<1x32xf32, #tpu.memory_space<vmem>>, %arg6: memref<32x128xbf16, #tpu.memory_space<vmem>>, %arg7: memref<1x128xf32, #tpu.memory_space<vmem>>, %arg8: memref<8x128xf32, #tpu.memory_space<vmem>>, %arg9: memref<8x32xf32, #tpu.memory_space<vmem>>, %arg10: memref<64x96xf32, #tpu.memory_space<vmem>>) attributes {dimension_semantics = [], scalar_prefetch = 0 : i64, scratch_operands = 1 : i64, tpu.core_type = #tpu.core_type<tc>} {
    %c0 = arith.constant 0 : index
    %c0_0 = arith.constant 0 : index
    %0 = vector.load %arg0[%c0, %c0_0] : memref<64x1xi32, #tpu.memory_space<vmem>>, vector<64x1xi32>
    %1 = tpu.iota {dimensions = array<i32: 1>} : vector<64x16xi32>
    %2 = vector.broadcast %0 : vector<64x1xi32> to vector<64x16xi32>
    %3 = arith.cmpi eq, %2, %1 : vector<64x16xi32>
    %4 = arith.extui %3 : vector<64x16xi1> to vector<64x16xi32>
    %5 = arith.sitofp %4 : vector<64x16xi32> to vector<64x16xf32>
    %6 = arith.truncf %5 : vector<64x16xf32> to vector<64x16xbf16>
    %c0_1 = arith.constant 0 : index
    %c0_2 = arith.constant 0 : index
    %7 = vector.load %arg1[%c0_1, %c0_2] : memref<16x96xbf16, #tpu.memory_space<vmem>>, vector<16x96xbf16>
    %cst = arith.constant dense<0.000000e+00> : vector<64x96xf32>
    %8 = tpu.matmul %6, %7, %cst {dimension_numbers = #tpu.dot_dimension_numbers<[1], [0], [0], [1], [0, 0, 1, 1], [], []>} : vector<64x16xbf16>, vector<16x96xbf16>, vector<64x96xf32> -> vector<64x96xf32>
    %c0_3 = arith.constant 0 : index
    %c0_4 = arith.constant 0 : index
    %9 = vector.load %arg4[%c0_3, %c0_4] : memref<1x96xf32, #tpu.memory_space<vmem>>, vector<1x96xf32>
    %10 = vector.broadcast %9 : vector<1x96xf32> to vector<64x96xf32>
    %11 = arith.addf %8, %10 : vector<64x96xf32>
    %c0_5 = arith.constant 0 : index
    %c0_6 = arith.constant 0 : index
    %12 = vector.load %arg10[%c0_5, %c0_6] : memref<64x96xf32, #tpu.memory_space<vmem>>, vector<64x96xf32>
    tpu.vector_store %arg10[%c0_5, %c0_6], %11 {strides = array<i32>} : memref<64x96xf32, #tpu.memory_space<vmem>>, vector<64x96xf32>,
    %c0_7 = arith.constant 0 : index
    %c0_8 = arith.constant 0 : index
    %13 = vector.load %arg3[%c0_7, %c0_8] : memref<32x96xbf16, #tpu.memory_space<vmem>>, vector<32x96xbf16>
    %c0_9 = arith.constant 0 : index
    %c0_10 = arith.constant 0 : index
    %14 = vector.load %arg5[%c0_9, %c0_10] : memref<1x32xf32, #tpu.memory_space<vmem>>, vector<1x32xf32>
    %15 = vector.shape_cast %14 : vector<1x32xf32> to vector<1x32xf32>
    %16 = vector.broadcast %15 : vector<1x32xf32> to vector<8x32xf32>
    %c0_11 = arith.constant 0 : index
    %c0_12 = arith.constant 0 : index
    %17 = vector.load %arg2[%c0_11, %c0_12] : memref<8x32xf32, #tpu.memory_space<vmem>>, vector<8x32xf32>
    %c0_i32 = arith.constant 0 : i32
    %18 = arith.truncf %17 : vector<8x32xf32> to vector<8x32xbf16>
    %cst_13 = arith.constant dense<0.000000e+00> : vector<8x96xf32>
    %19 = tpu.matmul %18, %13, %cst_13 {dimension_numbers = #tpu.dot_dimension_numbers<[1], [0], [0], [1], [0, 0, 1, 1], [], []>} : vector<8x32xbf16>, vector<32x96xbf16>, vector<8x96xf32> -> vector<8x96xf32>
    %c8_i32 = arith.constant 8 : i32
    %20 = arith.muli %c0_i32, %c8_i32 : i32
    %21 = tpu.assume_multiple %20, 8 : i32
    %22 = arith.index_cast %21 : i32 to index
    %c0_14 = arith.constant 0 : index
    %23 = vector.load %arg10[%22, %c0_14] : memref<64x96xf32, #tpu.memory_space<vmem>>, vector<8x96xf32>
    %24 = vector.extract_strided_slice %23 {offsets = [0, 0], sizes = [8, 32], strides = [1, 1]} : vector<8x96xf32> to vector<8x32xf32>
    %25 = vector.extract_strided_slice %19 {offsets = [0, 0], sizes = [8, 32], strides = [1, 1]} : vector<8x96xf32> to vector<8x32xf32>
    %26 = arith.addf %24, %25 : vector<8x32xf32>
    %27 = arith.negf %26 : vector<8x32xf32>
    %28 = math.exp %27 : vector<8x32xf32>
    %cst_15 = arith.constant 1.000000e+00 : f32
    %29 = vector.broadcast %cst_15 : f32 to vector<8x32xf32>
    %30 = arith.addf %29, %28 : vector<8x32xf32>
    %31 = arith.divf %29, %30 : vector<8x32xf32>
    %32 = vector.extract_strided_slice %23 {offsets = [0, 32], sizes = [8, 32], strides = [1, 1]} : vector<8x96xf32> to vector<8x32xf32>
    %33 = vector.extract_strided_slice %19 {offsets = [0, 32], sizes = [8, 32], strides = [1, 1]} : vector<8x96xf32> to vector<8x32xf32>
    %34 = arith.addf %32, %33 : vector<8x32xf32>
    %35 = arith.negf %34 : vector<8x32xf32>
    %36 = math.exp %35 : vector<8x32xf32>
    %cst_16 = arith.constant 1.000000e+00 : f32
    %37 = vector.broadcast %cst_16 : f32 to vector<8x32xf32>
    %38 = arith.addf %37, %36 : vector<8x32xf32>
    %39 = arith.divf %37, %38 : vector<8x32xf32>
    %40 = vector.extract_strided_slice %23 {offsets = [0, 64], sizes = [8, 32], strides = [1, 1]} : vector<8x96xf32> to vector<8x32xf32>
    %41 = vector.extract_strided_slice %19 {offsets = [0, 64], sizes = [8, 32], strides = [1, 1]} : vector<8x96xf32> to vector<8x32xf32>
    %42 = arith.addf %41, %16 : vector<8x32xf32>
    %43 = arith.mulf %31, %42 : vector<8x32xf32>
    %44 = arith.addf %40, %43 : vector<8x32xf32>
    %45 = math.tanh %44 : vector<8x32xf32>
    %cst_17 = arith.constant 1.000000e+00 : f32
    %46 = vector.broadcast %cst_17 : f32 to vector<8x32xf32>
    %47 = arith.subf %46, %39 : vector<8x32xf32>
    %48 = arith.mulf %47, %45 : vector<8x32xf32>
    %49 = arith.mulf %39, %17 : vector<8x32xf32>
    %50 = arith.addf %48, %49 : vector<8x32xf32>
    %c1_i32 = arith.constant 1 : i32
    %51 = arith.truncf %50 : vector<8x32xf32> to vector<8x32xbf16>
    %cst_18 = arith.constant dense<0.000000e+00> : vector<8x96xf32>
    %52 = tpu.matmul %51, %13, %cst_18 {dimension_numbers = #tpu.dot_dimension_numbers<[1], [0], [0], [1], [0, 0, 1, 1], [], []>} : vector<8x32xbf16>, vector<32x96xbf16>, vector<8x96xf32> -> vector<8x96xf32>
    %c8_i32_19 = arith.constant 8 : i32
    %53 = arith.muli %c1_i32, %c8_i32_19 : i32
    %54 = tpu.assume_multiple %53, 8 : i32
    %55 = arith.index_cast %54 : i32 to index
    %c0_20 = arith.constant 0 : index
    %56 = vector.load %arg10[%55, %c0_20] : memref<64x96xf32, #tpu.memory_space<vmem>>, vector<8x96xf32>
    %57 = vector.extract_strided_slice %56 {offsets = [0, 0], sizes = [8, 32], strides = [1, 1]} : vector<8x96xf32> to vector<8x32xf32>
    %58 = vector.extract_strided_slice %52 {offsets = [0, 0], sizes = [8, 32], strides = [1, 1]} : vector<8x96xf32> to vector<8x32xf32>
    %59 = arith.addf %57, %58 : vector<8x32xf32>
    %60 = arith.negf %59 : vector<8x32xf32>
    %61 = math.exp %60 : vector<8x32xf32>
    %cst_21 = arith.constant 1.000000e+00 : f32
    %62 = vector.broadcast %cst_21 : f32 to vector<8x32xf32>
    %63 = arith.addf %62, %61 : vector<8x32xf32>
    %64 = arith.divf %62, %63 : vector<8x32xf32>
    %65 = vector.extract_strided_slice %56 {offsets = [0, 32], sizes = [8, 32], strides = [1, 1]} : vector<8x96xf32> to vector<8x32xf32>
    %66 = vector.extract_strided_slice %52 {offsets = [0, 32], sizes = [8, 32], strides = [1, 1]} : vector<8x96xf32> to vector<8x32xf32>
    %67 = arith.addf %65, %66 : vector<8x32xf32>
    %68 = arith.negf %67 : vector<8x32xf32>
    %69 = math.exp %68 : vector<8x32xf32>
    %cst_22 = arith.constant 1.000000e+00 : f32
    %70 = vector.broadcast %cst_22 : f32 to vector<8x32xf32>
    %71 = arith.addf %70, %69 : vector<8x32xf32>
    %72 = arith.divf %70, %71 : vector<8x32xf32>
    %73 = vector.extract_strided_slice %56 {offsets = [0, 64], sizes = [8, 32], strides = [1, 1]} : vector<8x96xf32> to vector<8x32xf32>
    %74 = vector.extract_strided_slice %52 {offsets = [0, 64], sizes = [8, 32], strides = [1, 1]} : vector<8x96xf32> to vector<8x32xf32>
    %75 = arith.addf %74, %16 : vector<8x32xf32>
    %76 = arith.mulf %64, %75 : vector<8x32xf32>
    %77 = arith.addf %73, %76 : vector<8x32xf32>
    %78 = math.tanh %77 : vector<8x32xf32>
    %cst_23 = arith.constant 1.000000e+00 : f32
    %79 = vector.broadcast %cst_23 : f32 to vector<8x32xf32>
    %80 = arith.subf %79, %72 : vector<8x32xf32>
    %81 = arith.mulf %80, %78 : vector<8x32xf32>
    %82 = arith.mulf %72, %50 : vector<8x32xf32>
    %83 = arith.addf %81, %82 : vector<8x32xf32>
    %c2_i32 = arith.constant 2 : i32
    %84 = arith.truncf %83 : vector<8x32xf32> to vector<8x32xbf16>
    %cst_24 = arith.constant dense<0.000000e+00> : vector<8x96xf32>
    %85 = tpu.matmul %84, %13, %cst_24 {dimension_numbers = #tpu.dot_dimension_numbers<[1], [0], [0], [1], [0, 0, 1, 1], [], []>} : vector<8x32xbf16>, vector<32x96xbf16>, vector<8x96xf32> -> vector<8x96xf32>
    %c8_i32_25 = arith.constant 8 : i32
    %86 = arith.muli %c2_i32, %c8_i32_25 : i32
    %87 = tpu.assume_multiple %86, 8 : i32
    %88 = arith.index_cast %87 : i32 to index
    %c0_26 = arith.constant 0 : index
    %89 = vector.load %arg10[%88, %c0_26] : memref<64x96xf32, #tpu.memory_space<vmem>>, vector<8x96xf32>
    %90 = vector.extract_strided_slice %89 {offsets = [0, 0], sizes = [8, 32], strides = [1, 1]} : vector<8x96xf32> to vector<8x32xf32>
    %91 = vector.extract_strided_slice %85 {offsets = [0, 0], sizes = [8, 32], strides = [1, 1]} : vector<8x96xf32> to vector<8x32xf32>
    %92 = arith.addf %90, %91 : vector<8x32xf32>
    %93 = arith.negf %92 : vector<8x32xf32>
    %94 = math.exp %93 : vector<8x32xf32>
    %cst_27 = arith.constant 1.000000e+00 : f32
    %95 = vector.broadcast %cst_27 : f32 to vector<8x32xf32>
    %96 = arith.addf %95, %94 : vector<8x32xf32>
    %97 = arith.divf %95, %96 : vector<8x32xf32>
    %98 = vector.extract_strided_slice %89 {offsets = [0, 32], sizes = [8, 32], strides = [1, 1]} : vector<8x96xf32> to vector<8x32xf32>
    %99 = vector.extract_strided_slice %85 {offsets = [0, 32], sizes = [8, 32], strides = [1, 1]} : vector<8x96xf32> to vector<8x32xf32>
    %100 = arith.addf %98, %99 : vector<8x32xf32>
    %101 = arith.negf %100 : vector<8x32xf32>
    %102 = math.exp %101 : vector<8x32xf32>
    %cst_28 = arith.constant 1.000000e+00 : f32
    %103 = vector.broadcast %cst_28 : f32 to vector<8x32xf32>
    %104 = arith.addf %103, %102 : vector<8x32xf32>
    %105 = arith.divf %103, %104 : vector<8x32xf32>
    %106 = vector.extract_strided_slice %89 {offsets = [0, 64], sizes = [8, 32], strides = [1, 1]} : vector<8x96xf32> to vector<8x32xf32>
    %107 = vector.extract_strided_slice %85 {offsets = [0, 64], sizes = [8, 32], strides = [1, 1]} : vector<8x96xf32> to vector<8x32xf32>
    %108 = arith.addf %107, %16 : vector<8x32xf32>
    %109 = arith.mulf %97, %108 : vector<8x32xf32>
    %110 = arith.addf %106, %109 : vector<8x32xf32>
    %111 = math.tanh %110 : vector<8x32xf32>
    %cst_29 = arith.constant 1.000000e+00 : f32
    %112 = vector.broadcast %cst_29 : f32 to vector<8x32xf32>
    %113 = arith.subf %112, %105 : vector<8x32xf32>
    %114 = arith.mulf %113, %111 : vector<8x32xf32>
    %115 = arith.mulf %105, %83 : vector<8x32xf32>
    %116 = arith.addf %114, %115 : vector<8x32xf32>
    %c3_i32 = arith.constant 3 : i32
    %117 = arith.truncf %116 : vector<8x32xf32> to vector<8x32xbf16>
    %cst_30 = arith.constant dense<0.000000e+00> : vector<8x96xf32>
    %118 = tpu.matmul %117, %13, %cst_30 {dimension_numbers = #tpu.dot_dimension_numbers<[1], [0], [0], [1], [0, 0, 1, 1], [], []>} : vector<8x32xbf16>, vector<32x96xbf16>, vector<8x96xf32> -> vector<8x96xf32>
    %c8_i32_31 = arith.constant 8 : i32
    %119 = arith.muli %c3_i32, %c8_i32_31 : i32
    %120 = tpu.assume_multiple %119, 8 : i32
    %121 = arith.index_cast %120 : i32 to index
    %c0_32 = arith.constant 0 : index
    %122 = vector.load %arg10[%121, %c0_32] : memref<64x96xf32, #tpu.memory_space<vmem>>, vector<8x96xf32>
    %123 = vector.extract_strided_slice %122 {offsets = [0, 0], sizes = [8, 32], strides = [1, 1]} : vector<8x96xf32> to vector<8x32xf32>
    %124 = vector.extract_strided_slice %118 {offsets = [0, 0], sizes = [8, 32], strides = [1, 1]} : vector<8x96xf32> to vector<8x32xf32>
    %125 = arith.addf %123, %124 : vector<8x32xf32>
    %126 = arith.negf %125 : vector<8x32xf32>
    %127 = math.exp %126 : vector<8x32xf32>
    %cst_33 = arith.constant 1.000000e+00 : f32
    %128 = vector.broadcast %cst_33 : f32 to vector<8x32xf32>
    %129 = arith.addf %128, %127 : vector<8x32xf32>
    %130 = arith.divf %128, %129 : vector<8x32xf32>
    %131 = vector.extract_strided_slice %122 {offsets = [0, 32], sizes = [8, 32], strides = [1, 1]} : vector<8x96xf32> to vector<8x32xf32>
    %132 = vector.extract_strided_slice %118 {offsets = [0, 32], sizes = [8, 32], strides = [1, 1]} : vector<8x96xf32> to vector<8x32xf32>
    %133 = arith.addf %131, %132 : vector<8x32xf32>
    %134 = arith.negf %133 : vector<8x32xf32>
    %135 = math.exp %134 : vector<8x32xf32>
    %cst_34 = arith.constant 1.000000e+00 : f32
    %136 = vector.broadcast %cst_34 : f32 to vector<8x32xf32>
    %137 = arith.addf %136, %135 : vector<8x32xf32>
    %138 = arith.divf %136, %137 : vector<8x32xf32>
    %139 = vector.extract_strided_slice %122 {offsets = [0, 64], sizes = [8, 32], strides = [1, 1]} : vector<8x96xf32> to vector<8x32xf32>
    %140 = vector.extract_strided_slice %118 {offsets = [0, 64], sizes = [8, 32], strides = [1, 1]} : vector<8x96xf32> to vector<8x32xf32>
    %141 = arith.addf %140, %16 : vector<8x32xf32>
    %142 = arith.mulf %130, %141 : vector<8x32xf32>
    %143 = arith.addf %139, %142 : vector<8x32xf32>
    %144 = math.tanh %143 : vector<8x32xf32>
    %cst_35 = arith.constant 1.000000e+00 : f32
    %145 = vector.broadcast %cst_35 : f32 to vector<8x32xf32>
    %146 = arith.subf %145, %138 : vector<8x32xf32>
    %147 = arith.mulf %146, %144 : vector<8x32xf32>
    %148 = arith.mulf %138, %116 : vector<8x32xf32>
    %149 = arith.addf %147, %148 : vector<8x32xf32>
    %c4_i32 = arith.constant 4 : i32
    %150 = arith.truncf %149 : vector<8x32xf32> to vector<8x32xbf16>
    %cst_36 = arith.constant dense<0.000000e+00> : vector<8x96xf32>
    %151 = tpu.matmul %150, %13, %cst_36 {dimension_numbers = #tpu.dot_dimension_numbers<[1], [0], [0], [1], [0, 0, 1, 1], [], []>} : vector<8x32xbf16>, vector<32x96xbf16>, vector<8x96xf32> -> vector<8x96xf32>
    %c8_i32_37 = arith.constant 8 : i32
    %152 = arith.muli %c4_i32, %c8_i32_37 : i32
    %153 = tpu.assume_multiple %152, 8 : i32
    %154 = arith.index_cast %153 : i32 to index
    %c0_38 = arith.constant 0 : index
    %155 = vector.load %arg10[%154, %c0_38] : memref<64x96xf32, #tpu.memory_space<vmem>>, vector<8x96xf32>
    %156 = vector.extract_strided_slice %155 {offsets = [0, 0], sizes = [8, 32], strides = [1, 1]} : vector<8x96xf32> to vector<8x32xf32>
    %157 = vector.extract_strided_slice %151 {offsets = [0, 0], sizes = [8, 32], strides = [1, 1]} : vector<8x96xf32> to vector<8x32xf32>
    %158 = arith.addf %156, %157 : vector<8x32xf32>
    %159 = arith.negf %158 : vector<8x32xf32>
    %160 = math.exp %159 : vector<8x32xf32>
    %cst_39 = arith.constant 1.000000e+00 : f32
    %161 = vector.broadcast %cst_39 : f32 to vector<8x32xf32>
    %162 = arith.addf %161, %160 : vector<8x32xf32>
    %163 = arith.divf %161, %162 : vector<8x32xf32>
    %164 = vector.extract_strided_slice %155 {offsets = [0, 32], sizes = [8, 32], strides = [1, 1]} : vector<8x96xf32> to vector<8x32xf32>
    %165 = vector.extract_strided_slice %151 {offsets = [0, 32], sizes = [8, 32], strides = [1, 1]} : vector<8x96xf32> to vector<8x32xf32>
    %166 = arith.addf %164, %165 : vector<8x32xf32>
    %167 = arith.negf %166 : vector<8x32xf32>
    %168 = math.exp %167 : vector<8x32xf32>
    %cst_40 = arith.constant 1.000000e+00 : f32
    %169 = vector.broadcast %cst_40 : f32 to vector<8x32xf32>
    %170 = arith.addf %169, %168 : vector<8x32xf32>
    %171 = arith.divf %169, %170 : vector<8x32xf32>
    %172 = vector.extract_strided_slice %155 {offsets = [0, 64], sizes = [8, 32], strides = [1, 1]} : vector<8x96xf32> to vector<8x32xf32>
    %173 = vector.extract_strided_slice %151 {offsets = [0, 64], sizes = [8, 32], strides = [1, 1]} : vector<8x96xf32> to vector<8x32xf32>
    %174 = arith.addf %173, %16 : vector<8x32xf32>
    %175 = arith.mulf %163, %174 : vector<8x32xf32>
    %176 = arith.addf %172, %175 : vector<8x32xf32>
    %177 = math.tanh %176 : vector<8x32xf32>
    %cst_41 = arith.constant 1.000000e+00 : f32
    %178 = vector.broadcast %cst_41 : f32 to vector<8x32xf32>
    %179 = arith.subf %178, %171 : vector<8x32xf32>
    %180 = arith.mulf %179, %177 : vector<8x32xf32>
    %181 = arith.mulf %171, %149 : vector<8x32xf32>
    %182 = arith.addf %180, %181 : vector<8x32xf32>
    %c5_i32 = arith.constant 5 : i32
    %183 = arith.truncf %182 : vector<8x32xf32> to vector<8x32xbf16>
    %cst_42 = arith.constant dense<0.000000e+00> : vector<8x96xf32>
    %184 = tpu.matmul %183, %13, %cst_42 {dimension_numbers = #tpu.dot_dimension_numbers<[1], [0], [0], [1], [0, 0, 1, 1], [], []>} : vector<8x32xbf16>, vector<32x96xbf16>, vector<8x96xf32> -> vector<8x96xf32>
    %c8_i32_43 = arith.constant 8 : i32
    %185 = arith.muli %c5_i32, %c8_i32_43 : i32
    %186 = tpu.assume_multiple %185, 8 : i32
    %187 = arith.index_cast %186 : i32 to index
    %c0_44 = arith.constant 0 : index
    %188 = vector.load %arg10[%187, %c0_44] : memref<64x96xf32, #tpu.memory_space<vmem>>, vector<8x96xf32>
    %189 = vector.extract_strided_slice %188 {offsets = [0, 0], sizes = [8, 32], strides = [1, 1]} : vector<8x96xf32> to vector<8x32xf32>
    %190 = vector.extract_strided_slice %184 {offsets = [0, 0], sizes = [8, 32], strides = [1, 1]} : vector<8x96xf32> to vector<8x32xf32>
    %191 = arith.addf %189, %190 : vector<8x32xf32>
    %192 = arith.negf %191 : vector<8x32xf32>
    %193 = math.exp %192 : vector<8x32xf32>
    %cst_45 = arith.constant 1.000000e+00 : f32
    %194 = vector.broadcast %cst_45 : f32 to vector<8x32xf32>
    %195 = arith.addf %194, %193 : vector<8x32xf32>
    %196 = arith.divf %194, %195 : vector<8x32xf32>
    %197 = vector.extract_strided_slice %188 {offsets = [0, 32], sizes = [8, 32], strides = [1, 1]} : vector<8x96xf32> to vector<8x32xf32>
    %198 = vector.extract_strided_slice %184 {offsets = [0, 32], sizes = [8, 32], strides = [1, 1]} : vector<8x96xf32> to vector<8x32xf32>
    %199 = arith.addf %197, %198 : vector<8x32xf32>
    %200 = arith.negf %199 : vector<8x32xf32>
    %201 = math.exp %200 : vector<8x32xf32>
    %cst_46 = arith.constant 1.000000e+00 : f32
    %202 = vector.broadcast %cst_46 : f32 to vector<8x32xf32>
    %203 = arith.addf %202, %201 : vector<8x32xf32>
    %204 = arith.divf %202, %203 : vector<8x32xf32>
    %205 = vector.extract_strided_slice %188 {offsets = [0, 64], sizes = [8, 32], strides = [1, 1]} : vector<8x96xf32> to vector<8x32xf32>
    %206 = vector.extract_strided_slice %184 {offsets = [0, 64], sizes = [8, 32], strides = [1, 1]} : vector<8x96xf32> to vector<8x32xf32>
    %207 = arith.addf %206, %16 : vector<8x32xf32>
    %208 = arith.mulf %196, %207 : vector<8x32xf32>
    %209 = arith.addf %205, %208 : vector<8x32xf32>
    %210 = math.tanh %209 : vector<8x32xf32>
    %cst_47 = arith.constant 1.000000e+00 : f32
    %211 = vector.broadcast %cst_47 : f32 to vector<8x32xf32>
    %212 = arith.subf %211, %204 : vector<8x32xf32>
    %213 = arith.mulf %212, %210 : vector<8x32xf32>
    %214 = arith.mulf %204, %182 : vector<8x32xf32>
    %215 = arith.addf %213, %214 : vector<8x32xf32>
    %c6_i32 = arith.constant 6 : i32
    %216 = arith.truncf %215 : vector<8x32xf32> to vector<8x32xbf16>
    %cst_48 = arith.constant dense<0.000000e+00> : vector<8x96xf32>
    %217 = tpu.matmul %216, %13, %cst_48 {dimension_numbers = #tpu.dot_dimension_numbers<[1], [0], [0], [1], [0, 0, 1, 1], [], []>} : vector<8x32xbf16>, vector<32x96xbf16>, vector<8x96xf32> -> vector<8x96xf32>
    %c8_i32_49 = arith.constant 8 : i32
    %218 = arith.muli %c6_i32, %c8_i32_49 : i32
    %219 = tpu.assume_multiple %218, 8 : i32
    %220 = arith.index_cast %219 : i32 to index
    %c0_50 = arith.constant 0 : index
    %221 = vector.load %arg10[%220, %c0_50] : memref<64x96xf32, #tpu.memory_space<vmem>>, vector<8x96xf32>
    %222 = vector.extract_strided_slice %221 {offsets = [0, 0], sizes = [8, 32], strides = [1, 1]} : vector<8x96xf32> to vector<8x32xf32>
    %223 = vector.extract_strided_slice %217 {offsets = [0, 0], sizes = [8, 32], strides = [1, 1]} : vector<8x96xf32> to vector<8x32xf32>
    %224 = arith.addf %222, %223 : vector<8x32xf32>
    %225 = arith.negf %224 : vector<8x32xf32>
    %226 = math.exp %225 : vector<8x32xf32>
    %cst_51 = arith.constant 1.000000e+00 : f32
    %227 = vector.broadcast %cst_51 : f32 to vector<8x32xf32>
    %228 = arith.addf %227, %226 : vector<8x32xf32>
    %229 = arith.divf %227, %228 : vector<8x32xf32>
    %230 = vector.extract_strided_slice %221 {offsets = [0, 32], sizes = [8, 32], strides = [1, 1]} : vector<8x96xf32> to vector<8x32xf32>
    %231 = vector.extract_strided_slice %217 {offsets = [0, 32], sizes = [8, 32], strides = [1, 1]} : vector<8x96xf32> to vector<8x32xf32>
    %232 = arith.addf %230, %231 : vector<8x32xf32>
    %233 = arith.negf %232 : vector<8x32xf32>
    %234 = math.exp %233 : vector<8x32xf32>
    %cst_52 = arith.constant 1.000000e+00 : f32
    %235 = vector.broadcast %cst_52 : f32 to vector<8x32xf32>
    %236 = arith.addf %235, %234 : vector<8x32xf32>
    %237 = arith.divf %235, %236 : vector<8x32xf32>
    %238 = vector.extract_strided_slice %221 {offsets = [0, 64], sizes = [8, 32], strides = [1, 1]} : vector<8x96xf32> to vector<8x32xf32>
    %239 = vector.extract_strided_slice %217 {offsets = [0, 64], sizes = [8, 32], strides = [1, 1]} : vector<8x96xf32> to vector<8x32xf32>
    %240 = arith.addf %239, %16 : vector<8x32xf32>
    %241 = arith.mulf %229, %240 : vector<8x32xf32>
    %242 = arith.addf %238, %241 : vector<8x32xf32>
    %243 = math.tanh %242 : vector<8x32xf32>
    %cst_53 = arith.constant 1.000000e+00 : f32
    %244 = vector.broadcast %cst_53 : f32 to vector<8x32xf32>
    %245 = arith.subf %244, %237 : vector<8x32xf32>
    %246 = arith.mulf %245, %243 : vector<8x32xf32>
    %247 = arith.mulf %237, %215 : vector<8x32xf32>
    %248 = arith.addf %246, %247 : vector<8x32xf32>
    %c7_i32 = arith.constant 7 : i32
    %249 = arith.truncf %248 : vector<8x32xf32> to vector<8x32xbf16>
    %cst_54 = arith.constant dense<0.000000e+00> : vector<8x96xf32>
    %250 = tpu.matmul %249, %13, %cst_54 {dimension_numbers = #tpu.dot_dimension_numbers<[1], [0], [0], [1], [0, 0, 1, 1], [], []>} : vector<8x32xbf16>, vector<32x96xbf16>, vector<8x96xf32> -> vector<8x96xf32>
    %c8_i32_55 = arith.constant 8 : i32
    %251 = arith.muli %c7_i32, %c8_i32_55 : i32
    %252 = tpu.assume_multiple %251, 8 : i32
    %253 = arith.index_cast %252 : i32 to index
    %c0_56 = arith.constant 0 : index
    %254 = vector.load %arg10[%253, %c0_56] : memref<64x96xf32, #tpu.memory_space<vmem>>, vector<8x96xf32>
    %255 = vector.extract_strided_slice %254 {offsets = [0, 0], sizes = [8, 32], strides = [1, 1]} : vector<8x96xf32> to vector<8x32xf32>
    %256 = vector.extract_strided_slice %250 {offsets = [0, 0], sizes = [8, 32], strides = [1, 1]} : vector<8x96xf32> to vector<8x32xf32>
    %257 = arith.addf %255, %256 : vector<8x32xf32>
    %258 = arith.negf %257 : vector<8x32xf32>
    %259 = math.exp %258 : vector<8x32xf32>
    %cst_57 = arith.constant 1.000000e+00 : f32
    %260 = vector.broadcast %cst_57 : f32 to vector<8x32xf32>
    %261 = arith.addf %260, %259 : vector<8x32xf32>
    %262 = arith.divf %260, %261 : vector<8x32xf32>
    %263 = vector.extract_strided_slice %254 {offsets = [0, 32], sizes = [8, 32], strides = [1, 1]} : vector<8x96xf32> to vector<8x32xf32>
    %264 = vector.extract_strided_slice %250 {offsets = [0, 32], sizes = [8, 32], strides = [1, 1]} : vector<8x96xf32> to vector<8x32xf32>
    %265 = arith.addf %263, %264 : vector<8x32xf32>
    %266 = arith.negf %265 : vector<8x32xf32>
    %267 = math.exp %266 : vector<8x32xf32>
    %cst_58 = arith.constant 1.000000e+00 : f32
    %268 = vector.broadcast %cst_58 : f32 to vector<8x32xf32>
    %269 = arith.addf %268, %267 : vector<8x32xf32>
    %270 = arith.divf %268, %269 : vector<8x32xf32>
    %271 = vector.extract_strided_slice %254 {offsets = [0, 64], sizes = [8, 32], strides = [1, 1]} : vector<8x96xf32> to vector<8x32xf32>
    %272 = vector.extract_strided_slice %250 {offsets = [0, 64], sizes = [8, 32], strides = [1, 1]} : vector<8x96xf32> to vector<8x32xf32>
    %273 = arith.addf %272, %16 : vector<8x32xf32>
    %274 = arith.mulf %262, %273 : vector<8x32xf32>
    %275 = arith.addf %271, %274 : vector<8x32xf32>
    %276 = math.tanh %275 : vector<8x32xf32>
    %cst_59 = arith.constant 1.000000e+00 : f32
    %277 = vector.broadcast %cst_59 : f32 to vector<8x32xf32>
    %278 = arith.subf %277, %270 : vector<8x32xf32>
    %279 = arith.mulf %278, %276 : vector<8x32xf32>
    %280 = arith.mulf %270, %248 : vector<8x32xf32>
    %281 = arith.addf %279, %280 : vector<8x32xf32>
    %c8_i32_60 = arith.constant 8 : i32
    %c0_61 = arith.constant 0 : index
    %c0_62 = arith.constant 0 : index
    %282 = vector.load %arg9[%c0_61, %c0_62] : memref<8x32xf32, #tpu.memory_space<vmem>>, vector<8x32xf32>
    tpu.vector_store %arg9[%c0_61, %c0_62], %281 {strides = array<i32>} : memref<8x32xf32, #tpu.memory_space<vmem>>, vector<8x32xf32>,
    %283 = arith.truncf %281 : vector<8x32xf32> to vector<8x32xbf16>
    %c0_63 = arith.constant 0 : index
    %c0_64 = arith.constant 0 : index
    %284 = vector.load %arg6[%c0_63, %c0_64] : memref<32x128xbf16, #tpu.memory_space<vmem>>, vector<32x128xbf16>
    %cst_65 = arith.constant dense<0.000000e+00> : vector<8x128xf32>
    %285 = tpu.matmul %283, %284, %cst_65 {dimension_numbers = #tpu.dot_dimension_numbers<[1], [0], [0], [1], [0, 0, 1, 1], [], []>} : vector<8x32xbf16>, vector<32x128xbf16>, vector<8x128xf32> -> vector<8x128xf32>
    %c0_66 = arith.constant 0 : index
    %c0_67 = arith.constant 0 : index
    %286 = vector.load %arg7[%c0_66, %c0_67] : memref<1x128xf32, #tpu.memory_space<vmem>>, vector<1x128xf32>
    %287 = vector.broadcast %286 : vector<1x128xf32> to vector<8x128xf32>
    %288 = arith.addf %285, %287 : vector<8x128xf32>
    %c0_68 = arith.constant 0 : index
    %c0_69 = arith.constant 0 : index
    %289 = vector.load %arg8[%c0_68, %c0_69] : memref<8x128xf32, #tpu.memory_space<vmem>>, vector<8x128xf32>
    tpu.vector_store %arg8[%c0_68, %c0_69], %288 {strides = array<i32>} : memref<8x128xf32, #tpu.memory_space<vmem>>, vector<8x128xf32>,
    return
  }
}

</mosaic_0001>

<llo_original>
// kernel: forward.1
$region0: #{forward.1}
  #allocation0 [shape = 'u32[]', space=smem, size = 0x4, offset = 0x4, fixed_abs, tag = 'smem constant byte address 0x4 - core index']
  #allocation1 [shape = 'u32[144,128]{1,0:T(1,128)}', space=vmem, size = 0x12000, scoped, tag = 'internal scratch']
  #allocation2 [shape = 'f32[64,96]{1,0:T(8,128)}', space=vmem, size = 0x8000, scoped, tag = 'scratch operand']
  %s0 = inlined_call_operand.vmem [shape: s32[64,1], index: 0, kind: input, shape index: {}]
  %s1 = inlined_call_operand.vmem [shape: bf16[16,96], index: 1, kind: input, shape index: {}]
  %s2 = inlined_call_operand.vmem [shape: f32[8,32], index: 2, kind: input, shape index: {}]
  %s3 = inlined_call_operand.vmem [shape: bf16[32,96], index: 3, kind: input, shape index: {}]
  %s4 = inlined_call_operand.vmem [shape: f32[1,96], index: 4, kind: input, shape index: {}]
  %s5 = inlined_call_operand.vmem [shape: f32[1,32], index: 5, kind: input, shape index: {}]
  %s6 = inlined_call_operand.vmem [shape: bf16[32,128], index: 6, kind: input, shape index: {}]
  %s7 = inlined_call_operand.vmem [shape: f32[1,128], index: 7, kind: input, shape index: {}]
  %s8 = inlined_call_operand.vmem [shape: f32[8,128], index: 8, kind: output, shape index: {0}]
  %s9 = inlined_call_operand.vmem [shape: f32[8,32], index: 9, kind: output, shape index: {1}]
  %10 = xla_tuple %s8, %s9
  %s11 = sld [smem:[#allocation0]]
  $region50: #{forward.1} parent=0
    _
  %s13 = ssub.s32 1, %s11
  %s14 = scalar_select 0, %s13, %s11
  // Predicated region
  $region2: #{forward.1} parent=0 // pred_check
    _
  $region3: #{forward.1} parent=0 // pred_check_branch
    %16 = sbr.rel (0) target = $region5
  $region4: #{forward.1} parent=0 // pred_region
    _
  $region5: #{forward.1} parent=0 // pred_fallthru
    _
  // Predicated region
  $region6: #{forward.1} parent=0 // pred_check
    _
  $region7: #{forward.1} parent=0 // pred_check_branch
    %18 = sbr.rel (0) target = $region9
  $region8: #{forward.1} parent=0 // pred_region
    _
  $region9: #{forward.1} parent=0 // pred_fallthru
    _
  // Predicated region
  $region10: #{forward.1} parent=0 // pred_check
    _
  $region11: #{forward.1} parent=0 // pred_check_branch
    %20 = sbr.rel (0) target = $region13
  $region12: #{forward.1} parent=0 // pred_region
    _
  $region13: #{forward.1} parent=0 // pred_fallthru
    _
  // Predicated region
  $region14: #{forward.1} parent=0 // pred_check
    _
  $region15: #{forward.1} parent=0 // pred_check_branch
    %22 = sbr.rel (0) target = $region17
  $region16: #{forward.1} parent=0 // pred_region
    _
  $region17: #{forward.1} parent=0 // pred_fallthru
    _
  // Predicated region
  $region18: #{forward.1} parent=0 // pred_check
    _
  $region19: #{forward.1} parent=0 // pred_check_branch
    %24 = sbr.rel (0) target = $region21
  $region20: #{forward.1} parent=0 // pred_region
    _
  $region21: #{forward.1} parent=0 // pred_fallthru
    _
  // Predicated region
  $region22: #{forward.1} parent=0 // pred_check
    _
  $region23: #{forward.1} parent=0 // pred_check_branch
    %26 = sbr.rel (0) target = $region25
  $region24: #{forward.1} parent=0 // pred_region
    _
  $region25: #{forward.1} parent=0 // pred_fallthru
    _
  // Predicated region
  $region26: #{forward.1} parent=0 // pred_check
    _
  $region27: #{forward.1} parent=0 // pred_check_branch
    %28 = sbr.rel (0) target = $region29
  $region28: #{forward.1} parent=0 // pred_region
    _
  $region29: #{forward.1} parent=0 // pred_fallthru
    _
  // Predicated region
  $region30: #{forward.1} parent=0 // pred_check
    _
  $region31: #{forward.1} parent=0 // pred_check_branch
    %30 = sbr.rel (0) target = $region33
  $region32: #{forward.1} parent=0 // pred_region
    _
  $region33: #{forward.1} parent=0 // pred_fallthru
    _
  %v32 = vld [vmem:[%s0] sm:$0xff]
  %v33 = vld [vmem:[%s0 + $0x8] sm:$0xff]
  %v34 = vld [vmem:[%s0 + $0x10] sm:$0xff]
  %v35 = vld [vmem:[%s0 + $0x18] sm:$0xff]
  %v36 = vld [vmem:[%s0 + $0x20] sm:$0xff]
  %v37 = vld [vmem:[%s0 + $0x28] sm:$0xff]
  %v38 = vld [vmem:[%s0 + $0x30] sm:$0xff]
  %v39 = vld [vmem:[%s0 + $0x38] sm:$0xff]
  %v40 = vlaneseq
  %v41 = vand.u32 %v40, 127
  %42 = vset.pattern.permute.xlu0 0
  %43 = vperm.xlu0 %42, %v32
  %v44 = vpop.permute.xlu0 %43
  %45 = vset.pattern.permute.xlu0 0
  %46 = vperm.xlu0 %45, %v33
  %v47 = vpop.permute.xlu0 %46
  %48 = vset.pattern.permute.xlu0 0
  %49 = vperm.xlu0 %48, %v34
  %v50 = vpop.permute.xlu0 %49
  %51 = vset.pattern.permute.xlu0 0
  %52 = vperm.xlu0 %51, %v35
  %v53 = vpop.permute.xlu0 %52
  %54 = vset.pattern.permute.xlu0 0
  %55 = vperm.xlu0 %54, %v36
  %v56 = vpop.permute.xlu0 %55
  %57 = vset.pattern.permute.xlu0 0
  %58 = vperm.xlu0 %57, %v37
  %v59 = vpop.permute.xlu0 %58
  %60 = vset.pattern.permute.xlu0 0
  %61 = vperm.xlu0 %60, %v38
  %v62 = vpop.permute.xlu0 %61
  %63 = vset.pattern.permute.xlu0 0
  %64 = vperm.xlu0 %63, %v39
  %v65 = vpop.permute.xlu0 %64
  %vm66 = vcmp.eq.s32.totalorder %v44, %v41
  %vm67 = vcmp.eq.s32.totalorder %v47, %v41
  %vm68 = vcmp.eq.s32.totalorder %v50, %v41
  %vm69 = vcmp.eq.s32.totalorder %v53, %v41
  %vm70 = vcmp.eq.s32.totalorder %v56, %v41
  %vm71 = vcmp.eq.s32.totalorder %v59, %v41
  %vm72 = vcmp.eq.s32.totalorder %v62, %v41
  %vm73 = vcmp.eq.s32.totalorder %v65, %v41
  %v74 = vsel %vm66, 1, 0
  %v75 = vsel %vm67, 1, 0
  %v76 = vsel %vm68, 1, 0
  %v77 = vsel %vm69, 1, 0
  %v78 = vsel %vm70, 1, 0
  %v79 = vsel %vm71, 1, 0
  %v80 = vsel %vm72, 1, 0
  %v81 = vsel %vm73, 1, 0
  %v82 = vcvt.s32.f32 %v74
  %v83 = vcvt.s32.f32 %v75
  %v84 = vcvt.s32.f32 %v76
  %v85 = vcvt.s32.f32 %v77
  %v86 = vcvt.s32.f32 %v78
  %v87 = vcvt.s32.f32 %v79
  %v88 = vcvt.s32.f32 %v80
  %v89 = vcvt.s32.f32 %v81
  %v90 = vpack.c.bf16 %v83, %v82
  %v91 = vpack.c.bf16 %v85, %v84
  %v92 = vpack.c.bf16 %v87, %v86
  %v93 = vpack.c.bf16 %v89, %v88
  %v94 = vld [vmem:[%s1] sm:$0xf]
  %v95 = vld [vmem:[%s1 + $0x4] sm:$0xf]
  %v96 = vld [vmem:[%s4] sm:$0x1]
  %v98 = vlaneseq
  %v99 = vshrl.u32 %v98, 7
  %v100 = vsub.s32 0, %v99
  %v101 = vrot.slane %v96, %v100
  %v105 = vunpack.c.l.b16 %v94
  %v106 = vunpack.c.l.b16 %v95
  %v107 = vpack.c.b16 %v106, %v105
  %vm109 = vcmask 130048
  %v111 = vsel %vm109, %v90, 0
  %v114 = vsel %vm109, %v91, 0
  %v117 = vsel %vm109, %v92, 0
  %v120 = vsel %vm109, %v93, 0
  %122 = vmatprep.subr.bf16.mxu0 0
  %123 = vmatpush1.bf16.msra.mxu0 %v107
  %124 = vmatprep.subr.bf16.mxu0 0
  %125 = vmatpush1.bf16.msra.mxu0 0
  %126 = vmatprep.subr.bf16.mxu0 0
  %127 = vmatpush1.bf16.msra.mxu0 0
  %128 = vmatprep.subr.bf16.mxu0 0
  %129 = vmatpush1.bf16.msra.mxu0 0
  %130 = vmatprep.subr.bf16.mxu0 0
  %131 = vmatpush1.bf16.msra.mxu0 0
  %132 = vmatprep.subr.bf16.mxu0 0
  %133 = vmatpush1.bf16.msra.mxu0 0
  %134 = vmatprep.subr.bf16.mxu0 0
  %135 = vmatpush1.bf16.msra.mxu0 0
  %136 = vmatprep.subr.bf16.mxu0 0
  %137 = vmatpush1.bf16.msra.mxu0 0
  %138 = vmatprep.subr.bf16.mxu0 0
  %139 = vmatpush1.bf16.msra.mxu0 0
  %140 = vmatprep.subr.bf16.mxu0 0
  %141 = vmatpush1.bf16.msra.mxu0 0
  %142 = vmatprep.subr.bf16.mxu0 0
  %143 = vmatpush1.bf16.msra.mxu0 0
  %144 = vmatprep.subr.bf16.mxu0 0
  %145 = vmatpush1.bf16.msra.mxu0 0
  %146 = vmatprep.subr.bf16.mxu0 0
  %147 = vmatpush1.bf16.msra.mxu0 0
  %148 = vmatprep.subr.bf16.mxu0 0
  %149 = vmatpush1.bf16.msra.mxu0 0
  %150 = vmatprep.subr.bf16.mxu0 0
  %151 = vmatpush1.bf16.msra.mxu0 0
  %152 = vmatprep.subr.bf16.mxu0 0
  %153 = vmatpush1.bf16.msra.mxu0 0
  %154 = vmatprep.mubr.bf16.mxu0 0
  %155 = vmatmul.mubr.bf16.gmra.mrb[0].mxu0 %v111
  %v156 = vpop.f32.mrb[0].mxu0
  %v157 = vadd.f32 %v101, %v156
  %v158 = vpop.f32.mrb[0].mxu0
  %v159 = vpop.f32.mrb[0].mxu0
  %v160 = vadd.f32 %v101, %v159
  %v161 = vpop.f32.mrb[0].mxu0
  %162 = vmatprep.mubr.bf16.mxu0 0
  %163 = vmatmul.mubr.bf16.gmra.mrb[0].mxu0 %v114
  %v164 = vpop.f32.mrb[0].mxu0
  %v165 = vadd.f32 %v101, %v164
  %v166 = vpop.f32.mrb[0].mxu0
  %v167 = vpop.f32.mrb[0].mxu0
  %v168 = vadd.f32 %v101, %v167
  %v169 = vpop.f32.mrb[0].mxu0
  %170 = vmatprep.mubr.bf16.mxu0 0
  %171 = vmatmul.mubr.bf16.gmra.mrb[0].mxu0 %v117
  %v172 = vpop.f32.mrb[0].mxu0
  %v173 = vadd.f32 %v101, %v172
  %v174 = vpop.f32.mrb[0].mxu0
  %v175 = vpop.f32.mrb[0].mxu0
  %v176 = vadd.f32 %v101, %v175
  %v177 = vpop.f32.mrb[0].mxu0
  %178 = vmatprep.mubr.bf16.mxu0 0
  %179 = vmatmul.mubr.bf16.gmra.mrb[0].mxu0 %v120
  %v180 = vpop.f32.mrb[0].mxu0
  %v181 = vadd.f32 %v101, %v180
  %v182 = vpop.f32.mrb[0].mxu0
  %v183 = vpop.f32.mrb[0].mxu0
  %v184 = vadd.f32 %v101, %v183
  %v185 = vpop.f32.mrb[0].mxu0
  %186 = vdwg.mxu0
  %vm187 = vcmask 785408
  %188 = vst.msk [vmem:[#allocation2] sm:$0xff] %vm187, %v157
  %189 = vst.msk [vmem:[#allocation2 + $0x8] sm:$0xff] %vm187, %v160
  %190 = vst.msk [vmem:[#allocation2 + $0x10] sm:$0xff] %vm187, %v165
  %191 = vst.msk [vmem:[#allocation2 + $0x18] sm:$0xff] %vm187, %v168
  %192 = vst.msk [vmem:[#allocation2 + $0x20] sm:$0xff] %vm187, %v173
  %193 = vst.msk [vmem:[#allocation2 + $0x28] sm:$0xff] %vm187, %v176
  %194 = vst.msk [vmem:[#allocation2 + $0x30] sm:$0xff] %vm187, %v181
  %195 = vst.msk [vmem:[#allocation2 + $0x38] sm:$0xff] %vm187, %v184
  %v196 = vld [vmem:[%s3] sm:$0xf]
  %v197 = vld [vmem:[%s3 + $0x4] sm:$0xf]
  %v198 = vld [vmem:[%s3 + $0x8] sm:$0xf]
  %v199 = vld [vmem:[%s3 + $0xc] sm:$0xf]
  %v200 = vld [vmem:[%s5] sm:$0x1]
  %v202 = vlaneseq
  %v203 = vshrl.u32 %v202, 7
  %v204 = vsub.s32 0, %v203
  %v205 = vrot.slane %v200, %v204
  %v206 = vld [vmem:[%s2] sm:$0xff]
  %v207 = vpack.c.bf16 %v206, %v206
  %v212 = vunpack.c.l.b16 %v196
  %v213 = vunpack.c.l.b16 %v197
  %v214 = vunpack.c.l.b16 %v198
  %v215 = vunpack.c.l.b16 %v199
  %v216 = vpack.c.b16 %v213, %v212
  %v217 = vpack.c.b16 %v215, %v214
  %vm220 = vcmask 261120
  %v222 = vsel %vm220, %v207, 0
  %224 = vmatprep.subr.bf16.mxu0 0
  %225 = vmatpush1.bf16.msra.mxu0 %v216
  %226 = vmatprep.subr.bf16.mxu0 0
  %227 = vmatpush1.bf16.msra.mxu0 %v217
  %228 = vmatprep.subr.bf16.mxu0 0
  %229 = vmatpush1.bf16.msra.mxu0 0
  %230 = vmatprep.subr.bf16.mxu0 0
  %231 = vmatpush1.bf16.msra.mxu0 0
  %232 = vmatprep.subr.bf16.mxu0 0
  %233 = vmatpush1.bf16.msra.mxu0 0
  %234 = vmatprep.subr.bf16.mxu0 0
  %235 = vmatpush1.bf16.msra.mxu0 0
  %236 = vmatprep.subr.bf16.mxu0 0
  %237 = vmatpush1.bf16.msra.mxu0 0
  %238 = vmatprep.subr.bf16.mxu0 0
  %239 = vmatpush1.bf16.msra.mxu0 0
  %240 = vmatprep.subr.bf16.mxu0 0
  %241 = vmatpush1.bf16.msra.mxu0 0
  %242 = vmatprep.subr.bf16.mxu0 0
  %243 = vmatpush1.bf16.msra.mxu0 0
  %244 = vmatprep.subr.bf16.mxu0 0
  %245 = vmatpush1.bf16.msra.mxu0 0
  %246 = vmatprep.subr.bf16.mxu0 0
  %247 = vmatpush1.bf16.msra.mxu0 0
  %248 = vmatprep.subr.bf16.mxu0 0
  %249 = vmatpush1.bf16.msra.mxu0 0
  %250 = vmatprep.subr.bf16.mxu0 0
  %251 = vmatpush1.bf16.msra.mxu0 0
  %252 = vmatprep.subr.bf16.mxu0 0
  %253 = vmatpush1.bf16.msra.mxu0 0
  %254 = vmatprep.subr.bf16.mxu0 0
  %255 = vmatpush1.bf16.msra.mxu0 0
  %256 = vmatprep.mubr.bf16.mxu0 0
  %257 = vmatmul.mubr.bf16.gmra.mrb[0].mxu0 %v222
  %v258 = vpop.f32.mrb[0].mxu0
  %v259 = vadd.f32 0.0, %v258
  %v260 = vpop.f32.mrb[0].mxu0
  %v261 = vpop.f32.mrb[0].mxu0
  %v262 = vpop.f32.mrb[0].mxu0
  %263 = vdwg.mxu0
  %v264 = vld [vmem:[#allocation2] sm:$0xff]
  %v265 = vadd.f32 %v264, %v259
  %v266 = vxor.u32 %v265, 2147483648
  %v267 = vmul.f32 %v266, 1.442695
  %v268 = vpow.pop %v267
  %v269 = vadd.f32 %v268, 1.0
  %v270 = vrcp.pop %v269
  %v271 = vmul.f32 1.0, %v270
  %272 = vrot.lane.b32.xlu0 %v205, 64
  %v273 = vpop.permute.xlu0 %272
  %v275 = vadd.f32 %v259, %v273
  %277 = vrot.lane.b32.xlu0 %v275, 64
  %v278 = vpop.permute.xlu0 %277
  %v280 = vmul.f32 %v271, %v278
  %282 = vrot.lane.b32.xlu0 %v280, 64
  %v283 = vpop.permute.xlu0 %282
  %v285 = vadd.f32 %v264, %v283
  %v286 = vtanh.pop %v285
  %v287 = vsub.f32 1.0, %v271
  %289 = vrot.lane.b32.xlu0 %v286, 96
  %v290 = vpop.permute.xlu0 %289
  %v292 = vmul.f32 %v287, %v290
  %294 = vrot.lane.b32.xlu0 %v206, 32
  %v295 = vpop.permute.xlu0 %294
  %v297 = vmul.f32 %v271, %v295
  %v298 = vadd.f32 %v292, %v297
  %v299 = vpack.c.bf16 %v298, %v298
  %301 = vrot.lane.b32.xlu0 %v299, 96
  %v302 = vpop.permute.xlu0 %301
  %v304 = vsel %vm220, %v302, 0
  %306 = vmatprep.subr.bf16.mxu0 0
  %307 = vmatpush1.bf16.msra.mxu0 %v216
  %308 = vmatprep.subr.bf16.mxu0 0
  %309 = vmatpush1.bf16.msra.mxu0 %v217
  %310 = vmatprep.subr.bf16.mxu0 0
  %311 = vmatpush1.bf16.msra.mxu0 0
  %312 = vmatprep.subr.bf16.mxu0 0
  %313 = vmatpush1.bf16.msra.mxu0 0
  %314 = vmatprep.subr.bf16.mxu0 0
  %315 = vmatpush1.bf16.msra.mxu0 0
  %316 = vmatprep.subr.bf16.mxu0 0
  %317 = vmatpush1.bf16.msra.mxu0 0
  %318 = vmatprep.subr.bf16.mxu0 0
  %319 = vmatpush1.bf16.msra.mxu0 0
  %320 = vmatprep.subr.bf16.mxu0 0
  %321 = vmatpush1.bf16.msra.mxu0 0
  %322 = vmatprep.subr.bf16.mxu0 0
  %323 = vmatpush1.bf16.msra.mxu0 0
  %324 = vmatprep.subr.bf16.mxu0 0
  %325 = vmatpush1.bf16.msra.mxu0 0
  %326 = vmatprep.subr.bf16.mxu0 0
  %327 = vmatpush1.bf16.msra.mxu0 0
  %328 = vmatprep.subr.bf16.mxu0 0
  %329 = vmatpush1.bf16.msra.mxu0 0
  %330 = vmatprep.subr.bf16.mxu0 0
  %331 = vmatpush1.bf16.msra.mxu0 0
  %332 = vmatprep.subr.bf16.mxu0 0
  %333 = vmatpush1.bf16.msra.mxu0 0
  %334 = vmatprep.subr.bf16.mxu0 0
  %335 = vmatpush1.bf16.msra.mxu0 0
  %336 = vmatprep.subr.bf16.mxu0 0
  %337 = vmatpush1.bf16.msra.mxu0 0
  %338 = vmatprep.mubr.bf16.mxu0 0
  %339 = vmatmul.mubr.bf16.gmra.mrb[0].mxu0 %v304
  %v340 = vpop.f32.mrb[0].mxu0
  %v341 = vadd.f32 0.0, %v340
  %v342 = vpop.f32.mrb[0].mxu0
  %v343 = vpop.f32.mrb[0].mxu0
  %v344 = vpop.f32.mrb[0].mxu0
  %345 = vdwg.mxu0
  %s346 = scalar_lea.vmem [#allocation2], 8
  %v347 = vld [vmem:[%s346] sm:$0xff]
  %v348 = vadd.f32 %v347, %v341
  %v349 = vxor.u32 %v348, 2147483648
  %v350 = vmul.f32 %v349, 1.442695
  %v351 = vpow.pop %v350
  %v352 = vadd.f32 %v351, 1.0
  %v353 = vrcp.pop %v352
  %v354 = vmul.f32 1.0, %v353
  %v355 = vadd.f32 %v341, %v273
  %357 = vrot.lane.b32.xlu0 %v355, 64
  %v358 = vpop.permute.xlu0 %357
  %v360 = vmul.f32 %v354, %v358
  %362 = vrot.lane.b32.xlu0 %v360, 64
  %v363 = vpop.permute.xlu0 %362
  %v365 = vadd.f32 %v347, %v363
  %v366 = vtanh.pop %v365
  %v367 = vsub.f32 1.0, %v354
  %369 = vrot.lane.b32.xlu0 %v366, 96
  %v370 = vpop.permute.xlu0 %369
  %v372 = vmul.f32 %v367, %v370
  %v373 = vmul.f32 %v354, %v298
  %v374 = vadd.f32 %v372, %v373
  %v375 = vpack.c.bf16 %v374, %v374
  %377 = vrot.lane.b32.xlu0 %v375, 96
  %v378 = vpop.permute.xlu0 %377
  %v380 = vsel %vm220, %v378, 0
  %382 = vmatprep.subr.bf16.mxu0 0
  %383 = vmatpush1.bf16.msra.mxu0 %v216
  %384 = vmatprep.subr.bf16.mxu0 0
  %385 = vmatpush1.bf16.msra.mxu0 %v217
  %386 = vmatprep.subr.bf16.mxu0 0
  %387 = vmatpush1.bf16.msra.mxu0 0
  %388 = vmatprep.subr.bf16.mxu0 0
  %389 = vmatpush1.bf16.msra.mxu0 0
  %390 = vmatprep.subr.bf16.mxu0 0
  %391 = vmatpush1.bf16.msra.mxu0 0
  %392 = vmatprep.subr.bf16.mxu0 0
  %393 = vmatpush1.bf16.msra.mxu0 0
  %394 = vmatprep.subr.bf16.mxu0 0
  %395 = vmatpush1.bf16.msra.mxu0 0
  %396 = vmatprep.subr.bf16.mxu0 0
  %397 = vmatpush1.bf16.msra.mxu0 0
  %398 = vmatprep.subr.bf16.mxu0 0
  %399 = vmatpush1.bf16.msra.mxu0 0
  %400 = vmatprep.subr.bf16.mxu0 0
  %401 = vmatpush1.bf16.msra.mxu0 0
  %402 = vmatprep.subr.bf16.mxu0 0
  %403 = vmatpush1.bf16.msra.mxu0 0
  %404 = vmatprep.subr.bf16.mxu0 0
  %405 = vmatpush1.bf16.msra.mxu0 0
  %406 = vmatprep.subr.bf16.mxu0 0
  %407 = vmatpush1.bf16.msra.mxu0 0
  %408 = vmatprep.subr.bf16.mxu0 0
  %409 = vmatpush1.bf16.msra.mxu0 0
  %410 = vmatprep.subr.bf16.mxu0 0
  %411 = vmatpush1.bf16.msra.mxu0 0
  %412 = vmatprep.subr.bf16.mxu0 0
  %413 = vmatpush1.bf16.msra.mxu0 0
  %414 = vmatprep.mubr.bf16.mxu0 0
  %415 = vmatmul.mubr.bf16.gmra.mrb[0].mxu0 %v380
  %v416 = vpop.f32.mrb[0].mxu0
  %v417 = vadd.f32 0.0, %v416
  %v418 = vpop.f32.mrb[0].mxu0
  %v419 = vpop.f32.mrb[0].mxu0
  %v420 = vpop.f32.mrb[0].mxu0
  %421 = vdwg.mxu0
  %s422 = scalar_lea.vmem [#allocation2], 16
  %v423 = vld [vmem:[%s422] sm:$0xff]
  %v424 = vadd.f32 %v423, %v417
  %v425 = vxor.u32 %v424, 2147483648
  %v426 = vmul.f32 %v425, 1.442695
  %v427 = vpow.pop %v426
  %v428 = vadd.f32 %v427, 1.0
  %v429 = vrcp.pop %v428
  %v430 = vmul.f32 1.0, %v429
  %v431 = vadd.f32 %v417, %v273
  %433 = vrot.lane.b32.xlu0 %v431, 64
  %v434 = vpop.permute.xlu0 %433
  %v436 = vmul.f32 %v430, %v434
  %438 = vrot.lane.b32.xlu0 %v436, 64
  %v439 = vpop.permute.xlu0 %438
  %v441 = vadd.f32 %v423, %v439
  %v442 = vtanh.pop %v441
  %v443 = vsub.f32 1.0, %v430
  %445 = vrot.lane.b32.xlu0 %v442, 96
  %v446 = vpop.permute.xlu0 %445
  %v448 = vmul.f32 %v443, %v446
  %v449 = vmul.f32 %v430, %v374
  %v450 = vadd.f32 %v448, %v449
  %v451 = vpack.c.bf16 %v450, %v450
  %453 = vrot.lane.b32.xlu0 %v451, 96
  %v454 = vpop.permute.xlu0 %453
  %v456 = vsel %vm220, %v454, 0
  %458 = vmatprep.subr.bf16.mxu0 0
  %459 = vmatpush1.bf16.msra.mxu0 %v216
  %460 = vmatprep.subr.bf16.mxu0 0
  %461 = vmatpush1.bf16.msra.mxu0 %v217
  %462 = vmatprep.subr.bf16.mxu0 0
  %463 = vmatpush1.bf16.msra.mxu0 0
  %464 = vmatprep.subr.bf16.mxu0 0
  %465 = vmatpush1.bf16.msra.mxu0 0
  %466 = vmatprep.subr.bf16.mxu0 0
  %467 = vmatpush1.bf16.msra.mxu0 0
  %468 = vmatprep.subr.bf16.mxu0 0
  %469 = vmatpush1.bf16.msra.mxu0 0
  %470 = vmatprep.subr.bf16.mxu0 0
  %471 = vmatpush1.bf16.msra.mxu0 0
  %472 = vmatprep.subr.bf16.mxu0 0
  %473 = vmatpush1.bf16.msra.mxu0 0
  %474 = vmatprep.subr.bf16.mxu0 0
  %475 = vmatpush1.bf16.msra.mxu0 0
  %476 = vmatprep.subr.bf16.mxu0 0
  %477 = vmatpush1.bf16.msra.mxu0 0
  %478 = vmatprep.subr.bf16.mxu0 0
  %479 = vmatpush1.bf16.msra.mxu0 0
  %480 = vmatprep.subr.bf16.mxu0 0
  %481 = vmatpush1.bf16.msra.mxu0 0
  %482 = vmatprep.subr.bf16.mxu0 0
  %483 = vmatpush1.bf16.msra.mxu0 0
  %484 = vmatprep.subr.bf16.mxu0 0
  %485 = vmatpush1.bf16.msra.mxu0 0
  %486 = vmatprep.subr.bf16.mxu0 0
  %487 = vmatpush1.bf16.msra.mxu0 0
  %488 = vmatprep.subr.bf16.mxu0 0
  %489 = vmatpush1.bf16.msra.mxu0 0
  %490 = vmatprep.mubr.bf16.mxu0 0
  %491 = vmatmul.mubr.bf16.gmra.mrb[0].mxu0 %v456
  %v492 = vpop.f32.mrb[0].mxu0
  %v493 = vadd.f32 0.0, %v492
  %v494 = vpop.f32.mrb[0].mxu0
  %v495 = vpop.f32.mrb[0].mxu0
  %v496 = vpop.f32.mrb[0].mxu0
  %497 = vdwg.mxu0
  %s498 = scalar_lea.vmem [#allocation2], 24
  %v499 = vld [vmem:[%s498] sm:$0xff]
  %v500 = vadd.f32 %v499, %v493
  %v501 = vxor.u32 %v500, 2147483648
  %v502 = vmul.f32 %v501, 1.442695
  %v503 = vpow.pop %v502
  %v504 = vadd.f32 %v503, 1.0
  %v505 = vrcp.pop %v504
  %v506 = vmul.f32 1.0, %v505
  %v507 = vadd.f32 %v493, %v273
  %509 = vrot.lane.b32.xlu0 %v507, 64
  %v510 = vpop.permute.xlu0 %509
  %v512 = vmul.f32 %v506, %v510
  %514 = vrot.lane.b32.xlu0 %v512, 64
  %v515 = vpop.permute.xlu0 %514
  %v517 = vadd.f32 %v499, %v515
  %v518 = vtanh.pop %v517
  %v519 = vsub.f32 1.0, %v506
  %521 = vrot.lane.b32.xlu0 %v518, 96
  %v522 = vpop.permute.xlu0 %521
  %v524 = vmul.f32 %v519, %v522
  %v525 = vmul.f32 %v506, %v450
  %v526 = vadd.f32 %v524, %v525
  %v527 = vpack.c.bf16 %v526, %v526
  %529 = vrot.lane.b32.xlu0 %v527, 96
  %v530 = vpop.permute.xlu0 %529
  %v532 = vsel %vm220, %v530, 0
  %534 = vmatprep.subr.bf16.mxu0 0
  %535 = vmatpush1.bf16.msra.mxu0 %v216
  %536 = vmatprep.subr.bf16.mxu0 0
  %537 = vmatpush1.bf16.msra.mxu0 %v217
  %538 = vmatprep.subr.bf16.mxu0 0
  %539 = vmatpush1.bf16.msra.mxu0 0
  %540 = vmatprep.subr.bf16.mxu0 0
  %541 = vmatpush1.bf16.msra.mxu0 0
  %542 = vmatprep.subr.bf16.mxu0 0
  %543 = vmatpush1.bf16.msra.mxu0 0
  %544 = vmatprep.subr.bf16.mxu0 0
  %545 = vmatpush1.bf16.msra.mxu0 0
  %546 = vmatprep.subr.bf16.mxu0 0
  %547 = vmatpush1.bf16.msra.mxu0 0
  %548 = vmatprep.subr.bf16.mxu0 0
  %549 = vmatpush1.bf16.msra.mxu0 0
  %550 = vmatprep.subr.bf16.mxu0 0
  %551 = vmatpush1.bf16.msra.mxu0 0
  %552 = vmatprep.subr.bf16.mxu0 0
  %553 = vmatpush1.bf16.msra.mxu0 0
  %554 = vmatprep.subr.bf16.mxu0 0
  %555 = vmatpush1.bf16.msra.mxu0 0
  %556 = vmatprep.subr.bf16.mxu0 0
  %557 = vmatpush1.bf16.msra.mxu0 0
  %558 = vmatprep.subr.bf16.mxu0 0
  %559 = vmatpush1.bf16.msra.mxu0 0
  %560 = vmatprep.subr.bf16.mxu0 0
  %561 = vmatpush1.bf16.msra.mxu0 0
  %562 = vmatprep.subr.bf16.mxu0 0
  %563 = vmatpush1.bf16.msra.mxu0 0
  %564 = vmatprep.subr.bf16.mxu0 0
  %565 = vmatpush1.bf16.msra.mxu0 0
  %566 = vmatprep.mubr.bf16.mxu0 0
  %567 = vmatmul.mubr.bf16.gmra.mrb[0].mxu0 %v532
  %v568 = vpop.f32.mrb[0].mxu0
  %v569 = vadd.f32 0.0, %v568
  %v570 = vpop.f32.mrb[0].mxu0
  %v571 = vpop.f32.mrb[0].mxu0
  %v572 = vpop.f32.mrb[0].mxu0
  %573 = vdwg.mxu0
  %s574 = scalar_lea.vmem [#allocation2], 32
  %v575 = vld [vmem:[%s574] sm:$0xff]
  %v576 = vadd.f32 %v575, %v569
  %v577 = vxor.u32 %v576, 2147483648
  %v578 = vmul.f32 %v577, 1.442695
  %v579 = vpow.pop %v578
  %v580 = vadd.f32 %v579, 1.0
  %v581 = vrcp.pop %v580
  %v582 = vmul.f32 1.0, %v581
  %v583 = vadd.f32 %v569, %v273
  %585 = vrot.lane.b32.xlu0 %v583, 64
  %v586 = vpop.permute.xlu0 %585
  %v588 = vmul.f32 %v582, %v586
  %590 = vrot.lane.b32.xlu0 %v588, 64
  %v591 = vpop.permute.xlu0 %590
  %v593 = vadd.f32 %v575, %v591
  %v594 = vtanh.pop %v593
  %v595 = vsub.f32 1.0, %v582
  %597 = vrot.lane.b32.xlu0 %v594, 96
  %v598 = vpop.permute.xlu0 %597
  %v600 = vmul.f32 %v595, %v598
  %v601 = vmul.f32 %v582, %v526
  %v602 = vadd.f32 %v600, %v601
  %v603 = vpack.c.bf16 %v602, %v602
  %605 = vrot.lane.b32.xlu0 %v603, 96
  %v606 = vpop.permute.xlu0 %605
  %v608 = vsel %vm220, %v606, 0
  %610 = vmatprep.subr.bf16.mxu0 0
  %611 = vmatpush1.bf16.msra.mxu0 %v216
  %612 = vmatprep.subr.bf16.mxu0 0
  %613 = vmatpush1.bf16.msra.mxu0 %v217
  %614 = vmatprep.subr.bf16.mxu0 0
  %615 = vmatpush1.bf16.msra.mxu0 0
  %616 = vmatprep.subr.bf16.mxu0 0
  %617 = vmatpush1.bf16.msra.mxu0 0
  %618 = vmatprep.subr.bf16.mxu0 0
  %619 = vmatpush1.bf16.msra.mxu0 0
  %620 = vmatprep.subr.bf16.mxu0 0
  %621 = vmatpush1.bf16.msra.mxu0 0
  %622 = vmatprep.subr.bf16.mxu0 0
  %623 = vmatpush1.bf16.msra.mxu0 0
  %624 = vmatprep.subr.bf16.mxu0 0
  %625 = vmatpush1.bf16.msra.mxu0 0
  %626 = vmatprep.subr.bf16.mxu0 0
  %627 = vmatpush1.bf16.msra.mxu0 0
  %628 = vmatprep.subr.bf16.mxu0 0
  %629 = vmatpush1.bf16.msra.mxu0 0
  %630 = vmatprep.subr.bf16.mxu0 0
  %631 = vmatpush1.bf16.msra.mxu0 0
  %632 = vmatprep.subr.bf16.mxu0 0
  %633 = vmatpush1.bf16.msra.mxu0 0
  %634 = vmatprep.subr.bf16.mxu0 0
  %635 = vmatpush1.bf16.msra.mxu0 0
  %636 = vmatprep.subr.bf16.mxu0 0
  %637 = vmatpush1.bf16.msra.mxu0 0
  %638 = vmatprep.subr.bf16.mxu0 0
  %639 = vmatpush1.bf16.msra.mxu0 0
  %640 = vmatprep.subr.bf16.mxu0 0
  %641 = vmatpush1.bf16.msra.mxu0 0
  %642 = vmatprep.mubr.bf16.mxu0 0
  %643 = vmatmul.mubr.bf16.gmra.mrb[0].mxu0 %v608
  %v644 = vpop.f32.mrb[0].mxu0
  %v645 = vadd.f32 0.0, %v644
  %v646 = vpop.f32.mrb[0].mxu0
  %v647 = vpop.f32.mrb[0].mxu0
  %v648 = vpop.f32.mrb[0].mxu0
  %649 = vdwg.mxu0
  %s650 = scalar_lea.vmem [#allocation2], 40
  %v651 = vld [vmem:[%s650] sm:$0xff]
  %v652 = vadd.f32 %v651, %v645
  %v653 = vxor.u32 %v652, 2147483648
  %v654 = vmul.f32 %v653, 1.442695
  %v655 = vpow.pop %v654
  %v656 = vadd.f32 %v655, 1.0
  %v657 = vrcp.pop %v656
  %v658 = vmul.f32 1.0, %v657
  %v659 = vadd.f32 %v645, %v273
  %661 = vrot.lane.b32.xlu0 %v659, 64
  %v662 = vpop.permute.xlu0 %661
  %v664 = vmul.f32 %v658, %v662
  %666 = vrot.lane.b32.xlu0 %v664, 64
  %v667 = vpop.permute.xlu0 %666
  %v669 = vadd.f32 %v651, %v667
  %v670 = vtanh.pop %v669
  %v671 = vsub.f32 1.0, %v658
  %673 = vrot.lane.b32.xlu0 %v670, 96
  %v674 = vpop.permute.xlu0 %673
  %v676 = vmul.f32 %v671, %v674
  %v677 = vmul.f32 %v658, %v602
  %v678 = vadd.f32 %v676, %v677
  %v679 = vpack.c.bf16 %v678, %v678
  %681 = vrot.lane.b32.xlu0 %v679, 96
  %v682 = vpop.permute.xlu0 %681
  %v684 = vsel %vm220, %v682, 0
  %686 = vmatprep.subr.bf16.mxu0 0
  %687 = vmatpush1.bf16.msra.mxu0 %v216
  %688 = vmatprep.subr.bf16.mxu0 0
  %689 = vmatpush1.bf16.msra.mxu0 %v217
  %690 = vmatprep.subr.bf16.mxu0 0
  %691 = vmatpush1.bf16.msra.mxu0 0
  %692 = vmatprep.subr.bf16.mxu0 0
  %693 = vmatpush1.bf16.msra.mxu0 0
  %694 = vmatprep.subr.bf16.mxu0 0
  %695 = vmatpush1.bf16.msra.mxu0 0
  %696 = vmatprep.subr.bf16.mxu0 0
  %697 = vmatpush1.bf16.msra.mxu0 0
  %698 = vmatprep.subr.bf16.mxu0 0
  %699 = vmatpush1.bf16.msra.mxu0 0
  %700 = vmatprep.subr.bf16.mxu0 0
  %701 = vmatpush1.bf16.msra.mxu0 0
  %702 = vmatprep.subr.bf16.mxu0 0
  %703 = vmatpush1.bf16.msra.mxu0 0
  %704 = vmatprep.subr.bf16.mxu0 0
  %705 = vmatpush1.bf16.msra.mxu0 0
  %706 = vmatprep.subr.bf16.mxu0 0
  %707 = vmatpush1.bf16.msra.mxu0 0
  %708 = vmatprep.subr.bf16.mxu0 0
  %709 = vmatpush1.bf16.msra.mxu0 0
  %710 = vmatprep.subr.bf16.mxu0 0
  %711 = vmatpush1.bf16.msra.mxu0 0
  %712 = vmatprep.subr.bf16.mxu0 0
  %713 = vmatpush1.bf16.msra.mxu0 0
  %714 = vmatprep.subr.bf16.mxu0 0
  %715 = vmatpush1.bf16.msra.mxu0 0
  %716 = vmatprep.subr.bf16.mxu0 0
  %717 = vmatpush1.bf16.msra.mxu0 0
  %718 = vmatprep.mubr.bf16.mxu0 0
  %719 = vmatmul.mubr.bf16.gmra.mrb[0].mxu0 %v684
  %v720 = vpop.f32.mrb[0].mxu0
  %v721 = vadd.f32 0.0, %v720
  %v722 = vpop.f32.mrb[0].mxu0
  %v723 = vpop.f32.mrb[0].mxu0
  %v724 = vpop.f32.mrb[0].mxu0
  %725 = vdwg.mxu0
  %s726 = scalar_lea.vmem [#allocation2], 48
  %v727 = vld [vmem:[%s726] sm:$0xff]
  %v728 = vadd.f32 %v727, %v721
  %v729 = vxor.u32 %v728, 2147483648
  %v730 = vmul.f32 %v729, 1.442695
  %v731 = vpow.pop %v730
  %v732 = vadd.f32 %v731, 1.0
  %v733 = vrcp.pop %v732
  %v734 = vmul.f32 1.0, %v733
  %v735 = vadd.f32 %v721, %v273
  %737 = vrot.lane.b32.xlu0 %v735, 64
  %v738 = vpop.permute.xlu0 %737
  %v740 = vmul.f32 %v734, %v738
  %742 = vrot.lane.b32.xlu0 %v740, 64
  %v743 = vpop.permute.xlu0 %742
  %v745 = vadd.f32 %v727, %v743
  %v746 = vtanh.pop %v745
  %v747 = vsub.f32 1.0, %v734
  %749 = vrot.lane.b32.xlu0 %v746, 96
  %v750 = vpop.permute.xlu0 %749
  %v752 = vmul.f32 %v747, %v750
  %v753 = vmul.f32 %v734, %v678
  %v754 = vadd.f32 %v752, %v753
  %v755 = vpack.c.bf16 %v754, %v754
  %757 = vrot.lane.b32.xlu0 %v755, 96
  %v758 = vpop.permute.xlu0 %757
  %v760 = vsel %vm220, %v758, 0
  %762 = vmatprep.subr.bf16.mxu0 0
  %763 = vmatpush1.bf16.msra.mxu0 %v216
  %764 = vmatprep.subr.bf16.mxu0 0
  %765 = vmatpush1.bf16.msra.mxu0 %v217
  %766 = vmatprep.subr.bf16.mxu0 0
  %767 = vmatpush1.bf16.msra.mxu0 0
  %768 = vmatprep.subr.bf16.mxu0 0
  %769 = vmatpush1.bf16.msra.mxu0 0
  %770 = vmatprep.subr.bf16.mxu0 0
  %771 = vmatpush1.bf16.msra.mxu0 0
  %772 = vmatprep.subr.bf16.mxu0 0
  %773 = vmatpush1.bf16.msra.mxu0 0
  %774 = vmatprep.subr.bf16.mxu0 0
  %775 = vmatpush1.bf16.msra.mxu0 0
  %776 = vmatprep.subr.bf16.mxu0 0
  %777 = vmatpush1.bf16.msra.mxu0 0
  %778 = vmatprep.subr.bf16.mxu0 0
  %779 = vmatpush1.bf16.msra.mxu0 0
  %780 = vmatprep.subr.bf16.mxu0 0
  %781 = vmatpush1.bf16.msra.mxu0 0
  %782 = vmatprep.subr.bf16.mxu0 0
  %783 = vmatpush1.bf16.msra.mxu0 0
  %784 = vmatprep.subr.bf16.mxu0 0
  %785 = vmatpush1.bf16.msra.mxu0 0
  %786 = vmatprep.subr.bf16.mxu0 0
  %787 = vmatpush1.bf16.msra.mxu0 0
  %788 = vmatprep.subr.bf16.mxu0 0
  %789 = vmatpush1.bf16.msra.mxu0 0
  %790 = vmatprep.subr.bf16.mxu0 0
  %791 = vmatpush1.bf16.msra.mxu0 0
  %792 = vmatprep.subr.bf16.mxu0 0
  %793 = vmatpush1.bf16.msra.mxu0 0
  %794 = vmatprep.mubr.bf16.mxu0 0
  %795 = vmatmul.mubr.bf16.gmra.mrb[0].mxu0 %v760
  %v796 = vpop.f32.mrb[0].mxu0
  %v797 = vadd.f32 0.0, %v796
  %v798 = vpop.f32.mrb[0].mxu0
  %v799 = vpop.f32.mrb[0].mxu0
  %v800 = vpop.f32.mrb[0].mxu0
  %801 = vdwg.mxu0
  %s802 = scalar_lea.vmem [#allocation2], 56
  %v803 = vld [vmem:[%s802] sm:$0xff]
  %v804 = vadd.f32 %v803, %v797
  %v805 = vxor.u32 %v804, 2147483648
  %v806 = vmul.f32 %v805, 1.442695
  %v807 = vpow.pop %v806
  %v808 = vadd.f32 %v807, 1.0
  %v809 = vrcp.pop %v808
  %v810 = vmul.f32 1.0, %v809
  %v811 = vadd.f32 %v797, %v273
  %813 = vrot.lane.b32.xlu0 %v811, 64
  %v814 = vpop.permute.xlu0 %813
  %v816 = vmul.f32 %v810, %v814
  %818 = vrot.lane.b32.xlu0 %v816, 64
  %v819 = vpop.permute.xlu0 %818
  %v821 = vadd.f32 %v803, %v819
  %v822 = vtanh.pop %v821
  %v823 = vsub.f32 1.0, %v810
  %825 = vrot.lane.b32.xlu0 %v822, 96
  %v826 = vpop.permute.xlu0 %825
  %v828 = vmul.f32 %v823, %v826
  %v829 = vmul.f32 %v810, %v754
  %v830 = vadd.f32 %v828, %v829
  %832 = vrot.lane.b32.xlu0 %v830, 96
  %v833 = vpop.permute.xlu0 %832
  %835 = vst.msk [vmem:[%s9] sm:$0xff] %vm220, %v833
  %v836 = vpack.c.bf16 %v830, %v830
  %v837 = vld [vmem:[%s6] sm:$0xf]
  %v838 = vld [vmem:[%s6 + $0x4] sm:$0xf]
  %v839 = vld [vmem:[%s6 + $0x8] sm:$0xf]
  %v840 = vld [vmem:[%s6 + $0xc] sm:$0xf]
  %v841 = vld [vmem:[%s7] sm:$0x1]
  %v843 = vlaneseq
  %v844 = vshrl.u32 %v843, 7
  %v845 = vsub.s32 0, %v844
  %v846 = vrot.slane %v841, %v845
  %849 = vrot.lane.b32.xlu0 %v836, 96
  %v850 = vpop.permute.xlu0 %849
  %v855 = vunpack.c.l.b16 %v837
  %v856 = vunpack.c.l.b16 %v838
  %v857 = vunpack.c.l.b16 %v839
  %v858 = vunpack.c.l.b16 %v840
  %v859 = vpack.c.b16 %v856, %v855
  %v860 = vpack.c.b16 %v858, %v857
  %v864 = vsel %vm220, %v850, 0
  %866 = vmatprep.subr.bf16.mxu0 0
  %867 = vmatpush1.bf16.msra.mxu0 %v859
  %868 = vmatprep.subr.bf16.mxu0 0
  %869 = vmatpush1.bf16.msra.mxu0 %v860
  %870 = vmatprep.subr.bf16.mxu0 0
  %871 = vmatpush1.bf16.msra.mxu0 0
  %872 = vmatprep.subr.bf16.mxu0 0
  %873 = vmatpush1.bf16.msra.mxu0 0
  %874 = vmatprep.subr.bf16.mxu0 0
  %875 = vmatpush1.bf16.msra.mxu0 0
  %876 = vmatprep.subr.bf16.mxu0 0
  %877 = vmatpush1.bf16.msra.mxu0 0
  %878 = vmatprep.subr.bf16.mxu0 0
  %879 = vmatpush1.bf16.msra.mxu0 0
  %880 = vmatprep.subr.bf16.mxu0 0
  %881 = vmatpush1.bf16.msra.mxu0 0
  %882 = vmatprep.subr.bf16.mxu0 0
  %883 = vmatpush1.bf16.msra.mxu0 0
  %884 = vmatprep.subr.bf16.mxu0 0
  %885 = vmatpush1.bf16.msra.mxu0 0
  %886 = vmatprep.subr.bf16.mxu0 0
  %887 = vmatpush1.bf16.msra.mxu0 0
  %888 = vmatprep.subr.bf16.mxu0 0
  %889 = vmatpush1.bf16.msra.mxu0 0
  %890 = vmatprep.subr.bf16.mxu0 0
  %891 = vmatpush1.bf16.msra.mxu0 0
  %892 = vmatprep.subr.bf16.mxu0 0
  %893 = vmatpush1.bf16.msra.mxu0 0
  %894 = vmatprep.subr.bf16.mxu0 0
  %895 = vmatpush1.bf16.msra.mxu0 0
  %896 = vmatprep.subr.bf16.mxu0 0
  %897 = vmatpush1.bf16.msra.mxu0 0
  %898 = vmatprep.mubr.bf16.mxu0 0
  %899 = vmatmul.mubr.bf16.gmra.mrb[0].mxu0 %v864
  %v900 = vpop.f32.mrb[0].mxu0
  %v901 = vadd.f32 %v846, %v900
  %v902 = vpop.f32.mrb[0].mxu0
  %v903 = vpop.f32.mrb[0].mxu0
  %v904 = vpop.f32.mrb[0].mxu0
  %905 = vdwg.mxu0
  %906 = vst [vmem:[%s8] sm:$0xff] %v901
  // Predicated region
  $region34: #{forward.1} parent=0 // pred_check
    _
  $region35: #{forward.1} parent=0 // pred_check_branch
    %908 = sbr.rel (0) target = $region37
  $region36: #{forward.1} parent=0 // pred_region
    _
  $region37: #{forward.1} parent=0 // pred_fallthru
    _
  // Predicated region
  $region38: #{forward.1} parent=0 // pred_check
    _
  $region39: #{forward.1} parent=0 // pred_check_branch
    %910 = sbr.rel (0) target = $region41
  $region40: #{forward.1} parent=0 // pred_region
    _
  $region41: #{forward.1} parent=0 // pred_fallthru
    _
  // Predicated region
  $region42: #{forward.1} parent=0 // pred_check
    _
  $region43: #{forward.1} parent=0 // pred_check_branch
    %912 = sbr.rel (0) target = $region45
  $region44: #{forward.1} parent=0 // pred_region
    _
  $region45: #{forward.1} parent=0 // pred_fallthru
    _
  // Predicated region
  $region46: #{forward.1} parent=0 // pred_check
    _
  $region47: #{forward.1} parent=0 // pred_check_branch
    %914 = sbr.rel (0) target = $region49
  $region48: #{forward.1} parent=0 // pred_region
    _
  $region49: #{forward.1} parent=0 // pred_fallthru
    _

</llo_original>
